<compile_context>
chip_gen: v6e
topology: v6e:2x2x1
jax: 0.10.0
libtpu: 0.0.40
codegen_flags: <defaults>
</compile_context>

<pallas_src>
import jax
import jax.numpy as jnp
from jax import lax
from jax.experimental import pallas as pl
from jax.experimental.pallas import tpu as pltpu

_LANES = 128
_SUBLANES = 8
_MAX_TILE_ROWS = 8192          # (8192, 128) f32 block = 4 MiB per input
_SMALL_N = 1 << 17             # below this, fused XLA beats a kernel launch


def _round_up(x: int, m: int) -> int:
    return ((x + m - 1) // m) * m


def _plain_loss(ap, an, margin):
    """Pure-JAX elementwise+reduce (used for the fast path and ragged tails)."""
    ap32 = ap.astype(jnp.float32)
    an32 = an.astype(jnp.float32)
    return jnp.sum(jnp.maximum(jnp.exp(1.0 - ap32) - jnp.exp(1.0 - an32) + margin, 0.0))


def _make_kernel(margin: float, tile_rows: int, valid_rows_last: int, needs_mask: bool):
    """Build the kernel with all configuration folded in as Python constants."""
    margin = float(margin)
    groups_per_tile = tile_rows // _SUBLANES

    def _elem(ap, an):
        # exp on EUP; sub/add/max on VPU
        return jnp.maximum(jnp.exp(1.0 - ap) - jnp.exp(1.0 - an) + margin, 0.0)

    def _accumulate(ap_ref, an_ref, num_groups: int, partial_rows: int):
        """Stream (8,128) sublane groups into one f32 vreg accumulator."""

        def body(g, acc):
            r = pl.multiple_of(g * _SUBLANES, _SUBLANES)
            ap = ap_ref[pl.ds(r, _SUBLANES), :].astype(jnp.float32)
            an = an_ref[pl.ds(r, _SUBLANES), :].astype(jnp.float32)
            return acc + _elem(ap, an)

        acc = jnp.zeros((_SUBLANES, _LANES), jnp.float32)
        if num_groups > 0:
            unroll = max(1, min(8, num_groups))
            acc = lax.fori_loop(0, num_groups, body, acc, unroll=unroll)
        if partial_rows > 0:
            # one boundary group: static row mask (compile-time constant compare)
            r = num_groups * _SUBLANES
            ap = ap_ref[pl.ds(r, _SUBLANES), :].astype(jnp.float32)
            an = an_ref[pl.ds(r, _SUBLANES), :].astype(jnp.float32)
            row = lax.broadcasted_iota(jnp.int32, (_SUBLANES, _LANES), 0)
            acc = acc + jnp.where(row < partial_rows, _elem(ap, an), 0.0)
        return acc

    def kernel(ap_ref, an_ref, out_ref):
        if not needs_mask:
            out_ref[...] = _accumulate(ap_ref, an_ref, groups_per_tile, 0)
        else:
            i = pl.program_id(0)
            last = pl.num_programs(0) - 1

            @pl.when(i != last)
            def _():
                out_ref[...] = _accumulate(ap_ref, an_ref, groups_per_tile, 0)

            @pl.when(i == last)
            def _():
                out_ref[...] = _accumulate(
                    ap_ref, an_ref,
                    valid_rows_last // _SUBLANES,
                    valid_rows_last % _SUBLANES,
                )

    return kernel


def triplet_loss_siamese(score_ap: jax.Array, score_an: jax.Array, margin: float,
                         *, force_kernel: bool = False):
    assert score_ap.shape == score_an.shape
    margin = float(margin)
    n = int(score_ap.size)
    if n == 0:
        return jnp.zeros((), jnp.float32)

    ap = jnp.ravel(score_ap)   # no dtype upcast here: keep HBM bytes minimal
    an = jnp.ravel(score_an)

    if n < _SMALL_N and not force_kernel:
        # small-n fast path: a fused XLA elementwise+reduce beats a kernel launch
        return _plain_loss(ap, an, margin)

    rows = n // _LANES
    n_main = rows * _LANES

    # ragged sub-row tail (< 128 elements): plain JAX, negligible traffic
    tail = jnp.zeros((), jnp.float32)
    if n_main != n:
        tail = _plain_loss(ap[n_main:], an[n_main:], margin)
    if rows == 0:
        return tail

    ap_main = ap if n_main == n else ap[:n_main]
    an_main = an if n_main == n else an[:n_main]
    ap2d = ap_main.reshape(rows, _LANES)   # zero-copy reshape when n % 128 == 0
    an2d = an_main.reshape(rows, _LANES)

    # Big tiles to amortize per-step overhead, but keep >= 2 blocks when there
    # is enough work so the "parallel" axis feeds both v7x TensorCores.
    tile_rows = min(_MAX_TILE_ROWS, _round_up(pl.cdiv(rows, 2), _SUBLANES))
    tile_rows = max(tile_rows, _SUBLANES)
    num_blocks = pl.cdiv(rows, tile_rows)
    valid_rows_last = rows - (num_blocks - 1) * tile_rows
    needs_mask = valid_rows_last != tile_rows

    # 2 inputs x 2 pipeline buffers x block_bytes, plus headroom; capped so it
    # stays inside v7x's 64 MiB physical VMEM, raised above v5e's 16 MiB default.
    itemsize = jnp.dtype(ap2d.dtype).itemsize
    block_bytes = tile_rows * _LANES * itemsize
    vmem_limit = int(min(64 << 20, max(32 << 20, 4 * block_bytes + (16 << 20))))

    partials = pl.pallas_call(
        _make_kernel(margin, tile_rows, valid_rows_last, needs_mask),
        out_shape=jax.ShapeDtypeStruct((num_blocks * _SUBLANES, _LANES), jnp.float32),
        grid_spec=pl.GridSpec(
            grid=(num_blocks,),
            in_specs=[
                pl.BlockSpec((tile_rows, _LANES), lambda i: (i, 0)),
                pl.BlockSpec((tile_rows, _LANES), lambda i: (i, 0)),
            ],
            out_specs=pl.BlockSpec((_SUBLANES, _LANES), lambda i: (i, 0)),
        ),
        compiler_params=pltpu.CompilerParams(
            dimension_semantics=("parallel",),
            vmem_limit_bytes=vmem_limit,
        ),
    )(ap2d, an2d)

    # tiny final reduce over the lane-dense (8,128) partials in plain JAX
    return jnp.sum(partials) + tail


if __name__ == "__main__":
    margin = 1.0
    key = jax.random.PRNGKey(0)
    k1, k2, k3, k4, k5, k6 = jax.random.split(key, 6)

    def ref_loss(ap, an):
        return jnp.sum(jnp.maximum(jnp.exp(1.0 - ap) - jnp.exp(1.0 - an) + margin, 0.0))

    # Case 1: small batch (fast path), like cosine-similarity scores in [-1, 1]
    B1 = 256
    ap1 = jax.random.uniform(k1, (B1,), jnp.float32, minval=-1.0, maxval=1.0)
    an1 = jax.random.uniform(k2, (B1,), jnp.float32, minval=-1.0, maxval=1.0)
    out1 = jax.block_until_ready(triplet_loss_siamese(ap1, an1, margin))
    assert jnp.allclose(out1, ref_loss(ap1, an1), rtol=1e-4, atol=1e-4), out1

    # Case 2: force the Pallas kernel; non-multiple-of-128 size exercises the
    # ragged tail and the masked last block (rows=2 < tile_rows=8).
    B2 = 300
    ap2 = jax.random.uniform(k3, (B2,), jnp.float32, minval=-1.0, maxval=1.0)
    an2 = jax.random.uniform(k4, (B2,), jnp.float32, minval=-1.0, maxval=1.0)
    out2 = jax.block_until_ready(triplet_loss_siamese(ap2, an2, margin, force_kernel=True))
    assert jnp.allclose(out2, ref_loss(ap2, an2), rtol=1e-4, atol=1e-4), out2

    # Case 3: force the kernel with multiple grid blocks, a partially-valid
    # last block, and a sub-row tail (rows=33 -> tile_rows=24, 2 blocks).
    B3 = 33 * 128 + 5
    ap3 = jax.random.uniform(k5, (B3,), jnp.float32, minval=-1.0, maxval=1.0)
    an3 = jax.random.uniform(k6, (B3,), jnp.float32, minval=-1.0, maxval=1.0)
    out3 = jax.block_until_ready(triplet_loss_siamese(ap3, an3, margin, force_kernel=True))
    assert jnp.allclose(out3, ref_loss(ap3, an3), rtol=1e-4, atol=1e-4), out3

    print("KERNEL_OK")
</pallas_src>

<mosaic_0001>
module attributes {stable_mosaic.version = 11 : i64} {
  func.func @kernel(%arg0: i32, %arg1: memref<8x128xf32, #tpu.memory_space<vmem>>, %arg2: memref<8x128xf32, #tpu.memory_space<vmem>>, %arg3: memref<8x128xf32, #tpu.memory_space<vmem>>) attributes {dimension_semantics = [#tpu.dimension_semantics<parallel>], iteration_bounds = array<i64: 1>, scalar_prefetch = 0 : i64, scratch_operands = 0 : i64, tpu.core_type = #tpu.core_type<tc>, window_params = [{transform_indices = @transform_0, window_bounds = array<i64: 8, 128>}, {transform_indices = @transform_1, window_bounds = array<i64: 8, 128>}, {transform_indices = @transform_2, window_bounds = array<i64: 8, 128>}]} {
    %c0_i32 = arith.constant 0 : i32
    %0 = arith.cmpi ne, %arg0, %c0_i32 : i32
    %1 = arith.extui %0 : i1 to i32
    %c0_i32_0 = arith.constant 0 : i32
    %2 = arith.cmpi ne, %1, %c0_i32_0 : i32
    scf.if %2 {
      %cst = arith.constant 0.000000e+00 : f32
      %6 = vector.broadcast %cst : f32 to vector<8x128xf32>
      %c0_i32_3 = arith.constant 0 : i32
      %c8_i32 = arith.constant 8 : i32
      %7 = arith.muli %c0_i32_3, %c8_i32 : i32
      %8 = tpu.assume_multiple %7, 8 : i32
      %9 = arith.index_cast %8 : i32 to index
      %c0 = arith.constant 0 : index
      %10 = vector.load %arg1[%9, %c0] : memref<8x128xf32, #tpu.memory_space<vmem>>, vector<8x128xf32>
      %11 = arith.index_cast %8 : i32 to index
      %c0_4 = arith.constant 0 : index
      %12 = vector.load %arg2[%11, %c0_4] : memref<8x128xf32, #tpu.memory_space<vmem>>, vector<8x128xf32>
      %cst_5 = arith.constant 1.000000e+00 : f32
      %13 = vector.broadcast %cst_5 : f32 to vector<8x128xf32>
      %14 = arith.subf %13, %10 : vector<8x128xf32>
      %15 = math.exp %14 : vector<8x128xf32>
      %cst_6 = arith.constant 1.000000e+00 : f32
      %16 = vector.broadcast %cst_6 : f32 to vector<8x128xf32>
      %17 = arith.subf %16, %12 : vector<8x128xf32>
      %18 = math.exp %17 : vector<8x128xf32>
      %19 = arith.subf %15, %18 : vector<8x128xf32>
      %cst_7 = arith.constant 1.000000e+00 : f32
      %20 = vector.broadcast %cst_7 : f32 to vector<8x128xf32>
      %21 = arith.addf %19, %20 : vector<8x128xf32>
      %cst_8 = arith.constant 0.000000e+00 : f32
      %22 = vector.broadcast %cst_8 : f32 to vector<8x128xf32>
      %23 = arith.maximumf %21, %22 : vector<8x128xf32>
      %24 = arith.addf %6, %23 : vector<8x128xf32>
      %c1_i32 = arith.constant 1 : i32
      %c0_9 = arith.constant 0 : index
      %c0_10 = arith.constant 0 : index
      %25 = vector.load %arg3[%c0_9, %c0_10] : memref<8x128xf32, #tpu.memory_space<vmem>>, vector<8x128xf32>
      tpu.vector_store %arg3[%c0_9, %c0_10], %24 {strides = array<i32>} : memref<8x128xf32, #tpu.memory_space<vmem>>, vector<8x128xf32>,
    } else {
    }
    %c0_i32_1 = arith.constant 0 : i32
    %3 = arith.cmpi eq, %arg0, %c0_i32_1 : i32
    %4 = arith.extui %3 : i1 to i32
    %c0_i32_2 = arith.constant 0 : i32
    %5 = arith.cmpi ne, %4, %c0_i32_2 : i32
    scf.if %5 {
      %cst = arith.constant 0.000000e+00 : f32
      %6 = vector.broadcast %cst : f32 to vector<8x128xf32>
      %c0 = arith.constant 0 : index
      %c0_3 = arith.constant 0 : index
      %7 = vector.load %arg1[%c0, %c0_3] : memref<8x128xf32, #tpu.memory_space<vmem>>, vector<8x128xf32>
      %c0_4 = arith.constant 0 : index
      %c0_5 = arith.constant 0 : index
      %8 = vector.load %arg2[%c0_4, %c0_5] : memref<8x128xf32, #tpu.memory_space<vmem>>, vector<8x128xf32>
      %9 = tpu.iota {dimensions = array<i32: 0>} : vector<8x128xi32>
      %c2_i32 = arith.constant 2 : i32
      %10 = vector.broadcast %c2_i32 : i32 to vector<8x128xi32>
      %11 = arith.cmpi slt, %9, %10 : vector<8x128xi32>
      %cst_6 = arith.constant 1.000000e+00 : f32
      %12 = vector.broadcast %cst_6 : f32 to vector<8x128xf32>
      %13 = arith.subf %12, %7 : vector<8x128xf32>
      %14 = math.exp %13 : vector<8x128xf32>
      %cst_7 = arith.constant 1.000000e+00 : f32
      %15 = vector.broadcast %cst_7 : f32 to vector<8x128xf32>
      %16 = arith.subf %15, %8 : vector<8x128xf32>
      %17 = math.exp %16 : vector<8x128xf32>
      %18 = arith.subf %14, %17 : vector<8x128xf32>
      %cst_8 = arith.constant 1.000000e+00 : f32
      %19 = vector.broadcast %cst_8 : f32 to vector<8x128xf32>
      %20 = arith.addf %18, %19 : vector<8x128xf32>
      %cst_9 = arith.constant 0.000000e+00 : f32
      %21 = vector.broadcast %cst_9 : f32 to vector<8x128xf32>
      %22 = arith.maximumf %20, %21 : vector<8x128xf32>
      %cst_10 = arith.constant 0.000000e+00 : f32
      %23 = vector.broadcast %cst_10 : f32 to vector<8x128xf32>
      %24 = arith.select %11, %22, %23 : vector<8x128xi1>, vector<8x128xf32>
      %25 = arith.addf %6, %24 : vector<8x128xf32>
      %c0_11 = arith.constant 0 : index
      %c0_12 = arith.constant 0 : index
      %26 = vector.load %arg3[%c0_11, %c0_12] : memref<8x128xf32, #tpu.memory_space<vmem>>, vector<8x128xf32>
      tpu.vector_store %arg3[%c0_11, %c0_12], %25 {strides = array<i32>} : memref<8x128xf32, #tpu.memory_space<vmem>>, vector<8x128xf32>,
    } else {
    }
    return
  }
  func.func @transform_0(%arg0: i32) -> (i32, i32) {
    %c0_i32 = arith.constant 0 : i32
    %c0_i32_0 = arith.constant 0 : i32
    return %arg0, %c0_i32 : i32, i32
  }
  func.func @transform_1(%arg0: i32) -> (i32, i32) {
    %c0_i32 = arith.constant 0 : i32
    %c0_i32_0 = arith.constant 0 : i32
    return %arg0, %c0_i32 : i32, i32
  }
  func.func @transform_2(%arg0: i32) -> (i32, i32) {
    %c0_i32 = arith.constant 0 : i32
    %c0_i32_0 = arith.constant 0 : i32
    return %arg0, %c0_i32 : i32, i32
  }
}

</mosaic_0001>

<llo_original>
// kernel: tpu_custom_call.1
$region0: #{tpu_custom_call.1}
  #allocation0 [shape = 'u32[]', space=smem, size = 0x4, offset = 0x4, fixed_abs, tag = 'smem constant byte address 0x4 - core index']
  #allocation1 [shape = 'u32[144,128]{1,0:T(1,128)}', space=vmem, size = 0x12000, scoped, tag = 'internal scratch']
  %s0 = inlined_call_operand.hbm [shape: f32[2,128], index: 0, kind: input, shape index: {}]
  %s1 = inlined_call_operand.hbm [shape: f32[2,128], index: 1, kind: input, shape index: {}]
  %s2 = inlined_call_operand.hbm [shape: f32[8,128], index: 2, kind: output, shape index: {}]
  %s3 = sld [smem:[#allocation0]]
  $region34: #{tpu_custom_call.1} parent=0
    _
  %s5 = ssub.s32 1, %s3
  %s6 = scalar_select 0, %s5, %s3
  $region1: #{tpu_custom_call.1} parent=0
    #allocation2 [shape = 'u8[4096]{0}', space=vmem, size = 0x1000, scoped, tag = 'input window, operand 0, single buffered']
    #allocation3 [shape = 's32[1]{0}', space=sflag, size = 0x4, scoped, tag = 'scoped memory for tpu_custom_call.1']
    #allocation4 [shape = 's32[1]{0}', space=sflag, size = 0x4, scoped, tag = 'scoped memory for tpu_custom_call.1']
    #allocation5 [shape = 'u8[4096]{0}', space=vmem, size = 0x1000, scoped, tag = 'input window, operand 1, single buffered']
    #allocation6 [shape = 's32[1]{0}', space=sflag, size = 0x4, scoped, tag = 'scoped memory for tpu_custom_call.1']
    #allocation7 [shape = 'u8[4096]{0}', space=vmem, size = 0x1000, scoped, tag = 'output window, operand 0, single buffered']
    %7 = vsyncpa [#allocation3], 0
    %8 = vsyncpa [#allocation6], 0
    %9 = vsyncpa [#allocation4], 0
    // Predicated region
    $region2: #{tpu_custom_call.1} parent=1 // pred_check
      _
    $region3: #{tpu_custom_call.1} parent=1 // pred_check_branch
      %11 = sbr.rel (0) target = $region5
    $region4: #{tpu_custom_call.1} parent=1 // pred_region
      %s13 = ssub.s32 128, 32
      %14 = vsyncadd [#allocation3], %s13
      %s15 = sshll.u32 [#allocation2], 4
      %s16 = int_to_ptr.vmem [resolvable:$true] %s15
      %21 = dma.hbm_to_vmem [thread:$0]  %s0, 32, %s16, [#allocation3], 32, 32, 2
    $region5: #{tpu_custom_call.1} parent=1 // pred_fallthru
      _
    // Predicated region
    $region6: #{tpu_custom_call.1} parent=1 // pred_check
      _
    $region7: #{tpu_custom_call.1} parent=1 // pred_check_branch
      %23 = sbr.rel (0) target = $region9
    $region8: #{tpu_custom_call.1} parent=1 // pred_region
      %s25 = ssub.s32 128, 32
      %26 = vsyncadd [#allocation6], %s25
      %s27 = sshll.u32 [#allocation5], 4
      %s28 = int_to_ptr.vmem [resolvable:$true] %s27
      %33 = dma.hbm_to_vmem [thread:$0]  %s1, 32, %s28, [#allocation6], 32, 32, 2
    $region9: #{tpu_custom_call.1} parent=1 // pred_fallthru
      _
    // Predicated region
    $region10: #{tpu_custom_call.1} parent=1 // pred_check
      _
    $region11: #{tpu_custom_call.1} parent=1 // pred_check_branch
      %35 = sbr.rel (0) target = $region13
    $region12: #{tpu_custom_call.1} parent=1 // pred_region
      %36 = dma.done [#allocation3], 128
    $region13: #{tpu_custom_call.1} parent=1 // pred_fallthru
      _
    // Predicated region
    $region14: #{tpu_custom_call.1} parent=1 // pred_check
      _
    $region15: #{tpu_custom_call.1} parent=1 // pred_check_branch
      %38 = sbr.rel (0) target = $region17
    $region16: #{tpu_custom_call.1} parent=1 // pred_region
      %39 = dma.done [#allocation6], 128
    $region17: #{tpu_custom_call.1} parent=1 // pred_fallthru
      _
    %p40 = scmp.ne.s32.totalorder 0, 0
    // Predicated region
    $region18: #{tpu_custom_call.1} parent=1 // pred_check
      %p41 = pneg %p40
    $region19: #{tpu_custom_call.1} parent=1 // pred_check_branch
      %43 = sbr.rel (%p41) target = $region21
    $region20: #{tpu_custom_call.1} parent=1 // pred_region
      %v44 = vld [vmem:[#allocation2] sm:$0xff]
      %v45 = vld [vmem:[#allocation5] sm:$0xff]
      %v46 = vsub.f32 1.0, %v44
      %v47 = vmul.f32 %v46, 1.442695
      %v48 = vpow.pop %v47
      %v49 = vsub.f32 1.0, %v45
      %v50 = vmul.f32 %v49, 1.442695
      %v51 = vpow.pop %v50
      %v52 = vsub.f32 %v48, %v51
      %v53 = vadd.f32 %v52, 1.0
      %v54 = vmax.f32 %v53, 0.0
      %v55 = vadd.f32 %v54, 0.0
      %56 = vst [vmem:[#allocation7] sm:$0xff] %v55
    $region21: #{tpu_custom_call.1} parent=1 // pred_fallthru
      _
    %p57 = scmp.eq.s32.totalorder 0, 0
    // Predicated region
    $region22: #{tpu_custom_call.1} parent=1 // pred_check
      %p58 = pneg %p57
    $region23: #{tpu_custom_call.1} parent=1 // pred_check_branch
      %60 = sbr.rel (%p58) target = $region25
    $region24: #{tpu_custom_call.1} parent=1 // pred_region
      %v61 = vld [vmem:[#allocation2] sm:$0xff]
      %v62 = vld [vmem:[#allocation5] sm:$0xff]
      %v63 = vlaneseq
      %v64 = vshrl.u32 %v63, 7
      %vm65 = vcmp.lt.s32.totalorder %v64, 2
      %v66 = vsub.f32 1.0, %v61
      %v67 = vmul.f32 %v66, 1.442695
      %v68 = vpow.pop %v67
      %v69 = vsub.f32 1.0, %v62
      %v70 = vmul.f32 %v69, 1.442695
      %v71 = vpow.pop %v70
      %v72 = vsub.f32 %v68, %v71
      %v73 = vadd.f32 %v72, 1.0
      %v74 = vmax.f32 %v73, 0.0
      %v75 = vsel %vm65, %v74, 0.0
      %v76 = vadd.f32 %v75, 0.0
      %77 = vst [vmem:[#allocation7] sm:$0xff] %v76
    $region25: #{tpu_custom_call.1} parent=1 // pred_fallthru
      _
    // Predicated region
    $region26: #{tpu_custom_call.1} parent=1 // pred_check
      _
    $region27: #{tpu_custom_call.1} parent=1 // pred_check_branch
      %79 = sbr.rel (0) target = $region29
    $region28: #{tpu_custom_call.1} parent=1 // pred_region
      %s81 = ssub.s32 128, 128
      %82 = vsyncadd [#allocation4], %s81
      %s84 = sshll.u32 [#allocation7], 4
      %s85 = int_to_ptr.vmem [resolvable:$true] %s84
      %87 = dma.vmem_to_hbm [thread:$0]  %s85, 128, %s2, [#allocation4]
    $region29: #{tpu_custom_call.1} parent=1 // pred_fallthru
      _
    // Predicated region
    $region30: #{tpu_custom_call.1} parent=1 // pred_check
      _
    $region31: #{tpu_custom_call.1} parent=1 // pred_check_branch
      %89 = sbr.rel (0) target = $region33
    $region32: #{tpu_custom_call.1} parent=1 // pred_region
      %90 = dma.done [#allocation4], 128
    $region33: #{tpu_custom_call.1} parent=1 // pred_fallthru
      _
    %91 = vsyncpa [#allocation3], 1
    %92 = vsyncpa [#allocation6], 1
    %93 = vsyncpa [#allocation4], 1

</llo_original>
